<compile_context>
chip_gen: v6e
topology: v6e:2x2x1
jax: 0.10.0
libtpu: 0.0.40
codegen_flags: <defaults>
</compile_context>

<pallas_src>
import jax
import jax.numpy as jnp
from jax.experimental import pallas as pl
from jax.experimental.pallas import tpu as pltpu


# Lane-dense block width for the flattened spatial axis.  With C=2 float32 flow
# a block is C*TN*4 B = 1 MiB in + TN B = 128 KiB int8 out; double-buffered by
# the Pallas pipeline that's ~2.3 MiB of VMEM, comfortably under the scoped
# VMEM defaults on v5e (16 MiB), v6e (32 MiB) and v7x (32 MiB of 64 MiB).
_MAX_BLOCK_LANES = 128 * 1024  # multiple of 128


def _make_valid_mask_kernel(threshold):
    def kernel(flow_ref, o_ref):
        # flow_ref: (C, TN) block of flattened flow; o_ref: (1, TN) int8.
        f = flow_ref[...]
        ok = jnp.abs(f) < jnp.asarray(threshold, f.dtype)
        o_ref[...] = jnp.all(ok, axis=0, keepdims=True).astype(jnp.int8)

    return kernel


def compute_valid_flow_mask(flow, threshold=1000):
    """Pallas kernel: (|flow| < threshold).all(axis=0) -> bool (H, W)."""
    C, H, W = flow.shape
    N = H * W

    # Flatten spatial dims: lane-dense last axis is the biggest single lever
    # for a store-bound elementwise kernel.  Reshape of a contiguous CHW array
    # is free (no data movement).
    flow_flat = flow.reshape(C, N)

    # Tile the flattened axis in 128-multiples; cap block size so the pipeline
    # double-buffers instead of doing one monolithic DMA-in/compute/DMA-out.
    tn = min(_MAX_BLOCK_LANES, pl.cdiv(N, 128) * 128)
    grid = (pl.cdiv(N, tn),)

    mask_flat = pl.pallas_call(
        _make_valid_mask_kernel(threshold),
        out_shape=jax.ShapeDtypeStruct((1, N), jnp.int8),
        grid=grid,
        in_specs=[pl.BlockSpec((C, tn), lambda i: (0, i))],
        out_specs=pl.BlockSpec((1, tn), lambda i: (0, i)),
        compiler_params=pltpu.CompilerParams(
            dimension_semantics=("parallel",)
        ),
    )(flow_flat)

    # int8 {0,1} -> bool to match torch's bool mask dtype (1 B/px each way,
    # vs. the old int32 intermediate at 4 B/px).
    return mask_flat.reshape(H, W).astype(jnp.bool_)


def make_valid_flow_mask(img1, img2, flow, valid_flow_mask, threshold=1000):
    """Forward pass of MakeValidFlowMask (img1/img2/flow pass through)."""
    if flow is not None and valid_flow_mask is None:
        valid_flow_mask = compute_valid_flow_mask(flow, threshold=threshold)
    return (img1, img2, flow, valid_flow_mask)


if __name__ == "__main__":
    key = jax.random.PRNGKey(0)
    k1, k2, k3, k4 = jax.random.split(key, 4)

    # Small shapes consistent with the module: 2-channel flow over HxW.
    H, W = 16, 16
    img1 = jax.random.normal(k1, (3, H, W), dtype=jnp.float32)
    img2 = jax.random.normal(k2, (3, H, W), dtype=jnp.float32)
    # Scale so some entries exceed the threshold.
    flow = jax.random.normal(k3, (2, H, W), dtype=jnp.float32) * 800.0

    out_img1, out_img2, out_flow, valid_mask = make_valid_flow_mask(
        img1, img2, flow, None, threshold=1000
    )
    valid_mask = jax.block_until_ready(valid_mask)

    ref_mask = jnp.all(jnp.abs(flow) < 1000, axis=0)
    assert valid_mask.dtype == jnp.bool_
    assert valid_mask.shape == (H, W)
    assert bool(jnp.array_equal(valid_mask, ref_mask))

    # Non-128-multiple spatial size exercises the partial (masked) last block.
    H2, W2 = 24, 20  # N = 480, not a multiple of 128
    flow2 = jax.random.normal(k4, (2, H2, W2), dtype=jnp.float32) * 1500.0
    mask2 = jax.block_until_ready(compute_valid_flow_mask(flow2, threshold=1000))
    ref2 = jnp.all(jnp.abs(flow2) < 1000, axis=0)
    assert mask2.dtype == jnp.bool_
    assert mask2.shape == (H2, W2)
    assert bool(jnp.array_equal(mask2, ref2))

    # valid_flow_mask already provided -> pure passthrough, no kernel call.
    passthrough = make_valid_flow_mask(img1, img2, flow, ref_mask)
    assert passthrough[3] is ref_mask

    print("KERNEL_OK")
</pallas_src>

<mosaic_0001>
module attributes {stable_mosaic.version = 11 : i64} {
  func.func @kernel(%arg0: i32, %arg1: memref<2x256xf32, #tpu.memory_space<vmem>>, %arg2: memref<1x256xi8, #tpu.memory_space<vmem>>) attributes {dimension_semantics = [#tpu.dimension_semantics<parallel>], iteration_bounds = array<i64: 1>, scalar_prefetch = 0 : i64, scratch_operands = 0 : i64, tpu.core_type = #tpu.core_type<tc>, window_params = [{transform_indices = @transform_0, window_bounds = array<i64: 2, 256>}, {transform_indices = @transform_1, window_bounds = array<i64: 1, 256>}]} {
    %c0 = arith.constant 0 : index
    %c0_0 = arith.constant 0 : index
    %0 = vector.load %arg1[%c0, %c0_0] : memref<2x256xf32, #tpu.memory_space<vmem>>, vector<2x256xf32>
    %1 = math.absf %0 : vector<2x256xf32>
    %cst = arith.constant 1.000000e+03 : f32
    %2 = vector.broadcast %cst : f32 to vector<2x256xf32>
    %3 = arith.cmpf olt, %1, %2 : vector<2x256xf32>
    %cst_1 = arith.constant 1.000000e+00 : f32
    %cst_2 = arith.constant 0.000000e+00 : f32
    %4 = vector.broadcast %cst_1 : f32 to vector<2x256xf32>
    %5 = vector.broadcast %cst_2 : f32 to vector<2x256xf32>
    %6 = arith.select %3, %4, %5 : vector<2x256xi1>, vector<2x256xf32>
    %cst_3 = arith.constant dense<0x7F800000> : vector<256xf32>
    %7 = vector.multi_reduction <minimumf>, %6, %cst_3 [0] : vector<2x256xf32> to vector<256xf32>
    %cst_4 = arith.constant 0.000000e+00 : f32
    %8 = vector.broadcast %cst_4 : f32 to vector<256xf32>
    %9 = arith.cmpf ogt, %7, %8 : vector<256xf32>
    %10 = vector.shape_cast %9 : vector<256xi1> to vector<1x256xi1>
    %11 = arith.extui %10 : vector<1x256xi1> to vector<1x256xi8>
    %c0_5 = arith.constant 0 : index
    %c0_6 = arith.constant 0 : index
    %12 = vector.load %arg2[%c0_5, %c0_6] : memref<1x256xi8, #tpu.memory_space<vmem>>, vector<1x256xi8>
    tpu.vector_store %arg2[%c0_5, %c0_6], %11 {strides = array<i32>} : memref<1x256xi8, #tpu.memory_space<vmem>>, vector<1x256xi8>,
    return
  }
  func.func @transform_0(%arg0: i32) -> (i32, i32) {
    %c0_i32 = arith.constant 0 : i32
    %c0_i32_0 = arith.constant 0 : i32
    return %c0_i32, %arg0 : i32, i32
  }
  func.func @transform_1(%arg0: i32) -> (i32, i32) {
    %c0_i32 = arith.constant 0 : i32
    %c0_i32_0 = arith.constant 0 : i32
    return %c0_i32, %arg0 : i32, i32
  }
}

</mosaic_0001>

<llo_original>
// kernel: tpu_custom_call.1
$region0: #{tpu_custom_call.1}
  #allocation0 [shape = 'u32[]', space=smem, size = 0x4, offset = 0x4, fixed_abs, tag = 'smem constant byte address 0x4 - core index']
  #allocation1 [shape = 'u32[144,128]{1,0:T(1,128)}', space=vmem, size = 0x12000, scoped, tag = 'internal scratch']
  %s0 = inlined_call_operand.hbm [shape: f32[2,256], index: 0, kind: input, shape index: {}]
  %s1 = inlined_call_operand.hbm [shape: s8[1,256], index: 1, kind: output, shape index: {}]
  %s2 = sld [smem:[#allocation0]]
  $region18: #{tpu_custom_call.1} parent=0
    _
  %s4 = ssub.s32 1, %s2
  %s5 = scalar_select 0, %s4, %s2
  $region1: #{tpu_custom_call.1} parent=0
    #allocation2 [shape = 'u8[2048]{0}', space=vmem, size = 0x800, scoped, tag = 'input window, operand 0, single buffered']
    #allocation3 [shape = 's32[1]{0}', space=sflag, size = 0x4, scoped, tag = 'scoped memory for tpu_custom_call.1']
    #allocation4 [shape = 's32[1]{0}', space=sflag, size = 0x4, scoped, tag = 'scoped memory for tpu_custom_call.1']
    #allocation5 [shape = 'u8[1024]{0}', space=vmem, size = 0x400, scoped, tag = 'output window, operand 0, single buffered']
    %6 = vsyncpa [#allocation3], 0
    %7 = vsyncpa [#allocation4], 0
    // Predicated region
    $region2: #{tpu_custom_call.1} parent=1 // pred_check
      _
    $region3: #{tpu_custom_call.1} parent=1 // pred_check_branch
      %9 = sbr.rel (0) target = $region5
    $region4: #{tpu_custom_call.1} parent=1 // pred_region
      %s11 = ssub.s32 64, 64
      %12 = vsyncadd [#allocation3], %s11
      %s14 = sshll.u32 [#allocation2], 4
      %s15 = int_to_ptr.vmem [resolvable:$true] %s14
      %17 = dma.hbm_to_vmem [thread:$0]  %s0, 64, %s15, [#allocation3]
    $region5: #{tpu_custom_call.1} parent=1 // pred_fallthru
      _
    // Predicated region
    $region6: #{tpu_custom_call.1} parent=1 // pred_check
      _
    $region7: #{tpu_custom_call.1} parent=1 // pred_check_branch
      %19 = sbr.rel (0) target = $region9
    $region8: #{tpu_custom_call.1} parent=1 // pred_region
      %20 = dma.done [#allocation3], 64
    $region9: #{tpu_custom_call.1} parent=1 // pred_fallthru
      _
    %v23 = vld [vmem:[#allocation2] sm:$0xf]
    %v24 = vand.u32 2147483647, %v23
    %vm25 = vcmp.lt.f32.partialorder %v24, 1000.0
    %v26 = vsel %vm25, 1.0, 0.0
    %v29 = vunpack.c.l.s4 1983009808
    %v30 = vunpack.c.0.s8 %v29
    %v31 = vlaneseq
    %v32 = vshrl.u32 %v31, 7
    %v33 = vsub.s32 %v30, %v32
    %v34 = vrot.slane %v26, %v33
    %v35 = vcombine.high %v34, %v34
    %vm38 = vcmask 1041408
    %v39 = vsel %vm38, %v34, inf
    %v40 = vrot.slane %v39, 4
    %v41 = vmin.f32 %v39, %v40
    %v42 = vrot.slane %v41, 2
    %v43 = vmin.f32 %v41, %v42
    %v44 = vrot.slane %v43, 1
    %v45 = vmin.f32 %v43, %v44
    %v46 = vsel %vm38, %v35, inf
    %v47 = vrot.slane %v46, 4
    %v48 = vmin.f32 %v46, %v47
    %v49 = vrot.slane %v48, 2
    %v50 = vmin.f32 %v48, %v49
    %v51 = vrot.slane %v50, 1
    %v52 = vmin.f32 %v50, %v51
    %vm53 = vcmp.gt.f32.partialorder %v45, 0.0
    %vm54 = vcmp.gt.f32.partialorder %v52, 0.0
    %vm55 = vmpackc.low %vm54, %vm53
    %vm56 = vmpackc.even %vm55, %vm55
    %v57 = vsel %vm56, 16843009, 0
    %v58 = vlaneseq
    %v59 = vshrl.u32 %v58, 7
    %v60 = vsub.s32 0, %v59
    %v61 = vrot.slane %v57, %v60
    %v62 = vlaneseq
    %v63 = vshrl.u32 %v62, 7
    %v64 = vsub.s32 2, %v63
    %v65 = vrot.slane %v57, %v64
    %vm66 = vnez %v61
    %vm67 = vnez %v65
    %v68 = vsel %vm66, 16843009, 0
    %v69 = vsel %vm67, 16843009, 0
    %v70 = vcombine.low %v68, %v69
    %v72 = vunpack.c.l.s4 1966171168
    %v73 = vunpack.c.0.s8 %v72
    %v74 = vlaneseq
    %v75 = vshrl.u32 %v74, 7
    %v76 = vsub.s32 %v73, %v75
    %v77 = vrot.slane %v70, %v76
    %v79 = vunpack.c.l.s4 1966171168
    %v80 = vunpack.c.0.s8 %v79
    %v81 = vlaneseq
    %v82 = vshrl.u32 %v81, 7
    %v83 = vsub.s32 %v80, %v82
    %v84 = vrot.slane %v77, %v83
    %vm85 = vcmask 1040384
    %vm86 = vsmask.f32 0
    %vm87 = vmand %vm85, %vm86
    %vm88 = vcmask 1041409
    %vm89 = vsmask.f32 1024
    %vm90 = vmand %vm88, %vm89
    %vm91 = vmor %vm90, %vm87
    %v92 = vld [vmem:[#allocation5] sm:$0x3]
    %v93 = vsel %vm91, %v84, %v92
    %94 = vst [vmem:[#allocation5] sm:$0x3] %v93
    // Predicated region
    $region10: #{tpu_custom_call.1} parent=1 // pred_check
      _
    $region11: #{tpu_custom_call.1} parent=1 // pred_check_branch
      %96 = sbr.rel (0) target = $region13
    $region12: #{tpu_custom_call.1} parent=1 // pred_region
      %s98 = ssub.s32 32, 32
      %99 = vsyncadd [#allocation4], %s98
      %s101 = sshll.u32 [#allocation5], 4
      %s102 = int_to_ptr.vmem [resolvable:$true] %s101
      %104 = dma.vmem_to_hbm [thread:$0]  %s102, 32, %s1, [#allocation4]
    $region13: #{tpu_custom_call.1} parent=1 // pred_fallthru
      _
    // Predicated region
    $region14: #{tpu_custom_call.1} parent=1 // pred_check
      _
    $region15: #{tpu_custom_call.1} parent=1 // pred_check_branch
      %106 = sbr.rel (0) target = $region17
    $region16: #{tpu_custom_call.1} parent=1 // pred_region
      %107 = dma.done [#allocation4], 32
    $region17: #{tpu_custom_call.1} parent=1 // pred_fallthru
      _
    %108 = vsyncpa [#allocation3], 1
    %109 = vsyncpa [#allocation4], 1

</llo_original>
